<compile_context>
chip_gen: v5e
topology: v5e:2x2
jax: 0.10.0
libtpu: 0.0.40
codegen_flags: <defaults>
</compile_context>

<pallas_src>
import numpy as np

import jax
import jax.numpy as jnp
from jax import lax
from jax.experimental import pallas as pl
from jax.experimental.pallas import tpu as pltpu


def _round_up(x, m):
  return (x + m - 1) // m * m


def _vmem_limit(per_step_bytes):
  # Generous margin over the double-buffered working set, clamped to a value
  # that is safe on v7x's 64 MiB physical VMEM.
  return int(min(max(8 * per_step_bytes, 16 << 20), 64 << 20))


# ---------------------------------------------------------------------------
# Kernel 1: per-edge message.  Edges are pre-sorted by group
# g = edge_type (+R for the "out" half) and padded so every tile is
# group-homogeneous; tile_group (scalar prefetch) selects the fused weight
# block W[g] = Circ(rel_g) @ (in_w | out_w) in the index_map.
# ---------------------------------------------------------------------------
def _edge_msg_kernel(tile_group_ref, wf_ref, src_ref, msg_ref):
  del tile_group_ref                         # consumed only by the index_maps
  # message: softmax_c(ccorr(src, rel_g) @ W_half) == softmax_c(src @ W[g])
  m = jnp.dot(src_ref[...], wf_ref[0], preferred_element_type=jnp.float32)
  m = jnp.exp(m - jnp.max(m, axis=-1, keepdims=True))
  m = m * pl.reciprocal(jnp.sum(m, axis=-1, keepdims=True), approx=True)
  msg_ref[...] = m.astype(msg_ref.dtype)


# ---------------------------------------------------------------------------
# Kernel 2: per-destination softmax over in-edges (online, streaming over the
# edge tiles listed for this V-tile), aggregation, self-loop, bias, and fused
# BatchNorm partial statistics.  Grid = (V tiles, max contributing edge tiles).
# ---------------------------------------------------------------------------
def _node_agg_kernel(tile_list_ref, tile_count_ref,            # scalar prefetch
                     dst_ref, e_ref, norm_ref, msg_ref,
                     x_ref, loopw_ref, bias_ref,
                     out_ref, sum_ref, sq_ref,
                     m_sc, l_sc, acc_sc):
  i = pl.program_id(0)
  j = pl.program_id(1)

  @pl.when(j == 0)
  def _():
    m_sc[...] = jnp.full_like(m_sc, -1e30)
    l_sc[...] = jnp.zeros_like(l_sc)
    acc_sc[...] = jnp.zeros_like(acc_sc)

  # Only the edge tiles listed for this V-tile contribute; skipped steps keep
  # the same block index (list padded with its last entry) so no extra DMA.
  @pl.when(j < tile_count_ref[i])
  def _():
    tv = out_ref.shape[0]
    v_ids = i * tv + lax.broadcasted_iota(jnp.int32, (tv, 1), 0)
    mask = v_ids == dst_ref[...]             # [tv, te]; dst==V sentinel never matches
    sc = jnp.where(mask, e_ref[...], -1e30)
    m_new = jnp.maximum(m_sc[...], jnp.max(sc, axis=-1, keepdims=True))
    corr = jnp.exp(m_sc[...] - m_new)
    p = jnp.where(mask, jnp.exp(sc - m_new), 0.0)                # [tv, te]
    l_sc[...] = corr * l_sc[...] + jnp.sum(p, axis=-1, keepdims=True)
    pw = p * norm_ref[...]                   # fold edge_norm here (lane-dense row)
    acc_sc[...] = corr * acc_sc[...] + jnp.dot(
        pw.astype(msg_ref.dtype), msg_ref[...], preferred_element_type=jnp.float32)
    m_sc[...] = m_new

  @pl.when(j == pl.num_programs(1) - 1)
  def _():
    l = l_sc[...]
    # guard: nodes with zero in-edges get h = 0 (the torch reference would NaN).
    h = jnp.where(l > 0.0, acc_sc[...] / l, 0.0) * (1.0 / 3.0)
    loop = jnp.dot(x_ref[...], loopw_ref[...],
                   preferred_element_type=jnp.float32) * (1.0 / 3.0)
    y = h + loop + bias_ref[...]
    out_ref[...] = y
    # fused BN stats: per-V-tile partial sums replicated over 8 sublanes so the
    # (1, 8, Cout) block stays (8,128)-tile aligned; the wrapper reads sublane 0.
    ps = jnp.sum(y, axis=0, keepdims=True)[None]                 # (1, 1, Cout)
    pq = jnp.sum(y * y, axis=0, keepdims=True)[None]
    sum_ref[...] = jnp.broadcast_to(ps, sum_ref.shape)
    sq_ref[...] = jnp.broadcast_to(pq, sq_ref.shape)


# ---------------------------------------------------------------------------
# Kernel 3: BatchNorm1d (training mode) scale/shift apply (stats come from the
# fused partials of kernel 2).
# ---------------------------------------------------------------------------
def _bn_apply_kernel(y_ref, scale_ref, shift_ref, out_ref):
  out_ref[...] = y_ref[...] * scale_ref[...] + shift_ref[...]


# ---------------------------------------------------------------------------
# Wrapper: host-side index glue, fused-weight precompute, kernels.
# ---------------------------------------------------------------------------
def rgat_conv_forward(params, x, rel_repr, src, dst, edge_type, edge_norm,
                      *, edge_tile=128, agg_edge_tile=128, node_tile=128):
  """RGATConv forward.  Returns (x_out [V, Cout], rel_out [num_rel*2, Cout]).

  edge_tile     : kernel-1 (grouped matmul) tile.  Production: sweep 512..2048
                  on v5e/v6e, cap ~1024 on v7x (64 MiB VMEM), and keep
                  G*edge_tile (group-padding blow-up) under ~5-10% of E.
  agg_edge_tile : kernel-2 (aggregation) edge tile, 128..256 so the (tv, te)
                  mask/exp/p temporaries stay inside the vreg budget.  Must
                  divide edge_tile.
  node_tile     : V tile for aggregation / BN; 128 fills MXU rows.
  """
  V, Cin = x.shape
  Cout = params["in_w"].shape[1]
  E = int(src.shape[0])
  R = int(rel_repr.shape[0])                 # num_rel * 2
  G = 2 * R                                  # (relation, in/out-half) groups
  te, ta, tv = edge_tile, agg_edge_tile, node_tile
  assert E % 2 == 0 and V % tv == 0 and te % ta == 0
  rel = rel_repr                             # rel_wt is None (num_base <= 0)
  f32, bf16 = jnp.float32, jnp.bfloat16

  # ---- fused weights: ccorr(h, r) == h @ Circ(r) ----------------------------
  cidx = (np.arange(Cin)[:, None] + np.arange(Cin)[None, :]) % Cin
  circ_rel = rel[:, cidx]                                            # [R, Cin, Cin]
  w_fused = jnp.concatenate(
      [jnp.einsum("rjk,ko->rjo", circ_rel, params["in_w"]),
       jnp.einsum("rjk,ko->rjo", circ_rel, params["out_w"])], axis=0)  # [G, Cin, Cout]
  loop_w_f = params["loop_rel"][0][cidx] @ params["loop_w"]          # [Cin, Cout]

  # ---- host glue: sort edges by group, pad each group to edge_tile ----------
  src_np = np.asarray(src, dtype=np.int64)
  dst_np = np.asarray(dst, dtype=np.int64)
  type_np = np.asarray(edge_type, dtype=np.int64)
  g_np = np.where(np.arange(E) < E // 2, type_np, type_np + R)
  order = np.argsort(g_np, kind="stable")
  g_sorted = g_np[order]
  counts = np.bincount(g_np, minlength=G)
  starts = np.cumsum(counts) - counts
  pcounts = _round_up(counts, te)            # empty groups add zero padding
  pstarts = np.cumsum(pcounts) - pcounts
  pos = pstarts[g_sorted] + (np.arange(E) - starts[g_sorted])
  E_cap = max(int(pcounts.sum()), te)
  n_edge_tiles = E_cap // te
  n_agg_tiles = E_cap // ta
  # owner of a tile offset = last group whose padded start is <= offset
  tile_group = np.clip(
      np.searchsorted(pstarts, np.arange(n_edge_tiles) * te, side="right") - 1,
      0, G - 1).astype(np.int32)

  def scatter_np(vals, fill):
    out = np.full((E_cap,), fill, np.int64)
    out[pos] = vals[order]
    return out

  src_p = scatter_np(src_np, 0)
  dst_p = scatter_np(dst_np, V)              # V = sentinel: matches no node row
  type_p = scatter_np(type_np, 0)

  # ---- host glue: per-V-tile compacted list of contributing agg edge tiles --
  nvt = V // tv
  etile = np.arange(E_cap) // ta
  real = dst_p < V
  hit = np.zeros((nvt, n_agg_tiles), dtype=bool)
  hit[dst_p[real] // tv, etile[real]] = True
  tile_count = hit.sum(axis=1).astype(np.int32)
  max_tiles = max(int(tile_count.max()) if tile_count.size else 0, 1)
  tile_list = np.zeros((nvt, max_tiles), dtype=np.int32)
  for vt in range(nvt):                      # TODO(synk): vectorize for huge V
    idxs = np.flatnonzero(hit[vt])
    if idxs.size:
      tile_list[vt, :idxs.size] = idxs
      tile_list[vt, idxs.size:] = idxs[-1]   # pad with last entry -> no extra DMA

  # ---- device-side data prep -------------------------------------------------
  src_h = x[src_p].astype(bf16)                                      # [E_cap, Cin]
  norm_p = jnp.zeros((E_cap,), f32).at[pos].set(edge_norm.astype(f32)[order])
  norm_row = norm_p.reshape(1, E_cap)
  dst_row = jnp.asarray(dst_p.astype(np.int32)).reshape(1, E_cap)

  # attention score e = leaky_relu(aw_s.src + aw_r.rel + aw_d.dst): per-edge
  # scalars from tiny per-node / per-relation XLA matmuls (no dst_h stream and
  # no M=1 score dots inside kernel 1).
  attn_w = params["attn_w"][0]               # [3*Cin]
  s_src = x @ attn_w[:Cin]                   # [V]
  s_dst = x @ attn_w[2 * Cin:]               # [V]
  s_rel = rel @ attn_w[Cin:2 * Cin]          # [R]
  a = s_src[src_p] + s_rel[type_p] + s_dst[np.minimum(dst_p, V - 1)]
  e_row = jnp.where(a >= 0.0, a, 0.01 * a).astype(f32).reshape(1, E_cap)

  # ---- kernel 1: per-edge message (one MXU matmul per group-homogeneous tile)
  k1_step_bytes = 2 * (te * Cin + Cin * Cout + te * Cout)            # bf16 blocks
  msg = pl.pallas_call(
      _edge_msg_kernel,
      grid_spec=pltpu.PrefetchScalarGridSpec(
          num_scalar_prefetch=1,
          grid=(n_edge_tiles,),
          in_specs=[
              pl.BlockSpec((1, Cin, Cout), lambda i, tg: (tg[i], 0, 0)),   # W[g]
              pl.BlockSpec((te, Cin), lambda i, tg: (i, 0)),               # src_h
              # NOTE: if profiling shows exposed DMA at large edge_tile, add
              # pipeline_mode=pl.Buffered(3) to the src_h / msg specs.
          ],
          out_specs=pl.BlockSpec((te, Cout), lambda i, tg: (i, 0)),
      ),
      out_shape=jax.ShapeDtypeStruct((E_cap, Cout), bf16),
      compiler_params=pltpu.CompilerParams(
          dimension_semantics=("parallel",),
          vmem_limit_bytes=_vmem_limit(k1_step_bytes)),
  )(jnp.asarray(tile_group), w_fused.astype(bf16), src_h)

  # ---- kernel 2: dst-bucketed streaming softmax aggregation + self-loop +
  #      bias + fused BN partial stats ----------------------------------------
  k2_step_bytes = (3 * ta * 4 + ta * Cout * 2 + tv * Cin * 2 + Cin * Cout * 2
                   + Cout * 4 + tv * Cout * 4 + 2 * 8 * Cout * 4
                   + tv * Cout * 4 + 2 * tv * 4)
  y_pre, bn_sum_p, bn_sq_p = pl.pallas_call(
      _node_agg_kernel,
      grid_spec=pltpu.PrefetchScalarGridSpec(
          num_scalar_prefetch=2,
          grid=(nvt, max_tiles),
          in_specs=[
              pl.BlockSpec((1, ta), lambda i, j, tl, tc: (0, tl[i, j])),     # dst ids
              pl.BlockSpec((1, ta), lambda i, j, tl, tc: (0, tl[i, j])),     # e scores
              pl.BlockSpec((1, ta), lambda i, j, tl, tc: (0, tl[i, j])),     # edge_norm
              pl.BlockSpec((ta, Cout), lambda i, j, tl, tc: (tl[i, j], 0)),  # msg
              pl.BlockSpec((tv, Cin), lambda i, j, tl, tc: (i, 0)),          # x
              pl.BlockSpec((Cin, Cout), lambda i, j, tl, tc: (0, 0)),        # loop_W
              pl.BlockSpec((1, Cout), lambda i, j, tl, tc: (0, 0)),          # bias
          ],
          out_specs=[
              pl.BlockSpec((tv, Cout), lambda i, j, tl, tc: (i, 0)),         # y (pre-BN)
              pl.BlockSpec((1, 8, Cout), lambda i, j, tl, tc: (i, 0, 0)),    # BN part. sum
              pl.BlockSpec((1, 8, Cout), lambda i, j, tl, tc: (i, 0, 0)),    # BN part. sumsq
          ],
          scratch_shapes=[pltpu.VMEM((tv, 1), f32),
                          pltpu.VMEM((tv, 1), f32),
                          pltpu.VMEM((tv, Cout), f32)]),
      out_shape=[jax.ShapeDtypeStruct((V, Cout), f32),
                 jax.ShapeDtypeStruct((nvt, 8, Cout), f32),
                 jax.ShapeDtypeStruct((nvt, 8, Cout), f32)],
      compiler_params=pltpu.CompilerParams(
          dimension_semantics=("parallel", "arbitrary"),
          vmem_limit_bytes=_vmem_limit(k2_step_bytes)),
  )(jnp.asarray(tile_list), jnp.asarray(tile_count),
    dst_row, e_row, norm_row, msg, x.astype(bf16), loop_w_f.astype(bf16),
    params["bias"].reshape(1, Cout).astype(f32))

  # ---- kernel 3: BatchNorm1d (training) apply; global stats from the fused
  #      per-tile partials via a tiny XLA reduce --------------------------------
  n_inv = 1.0 / V
  mu = jnp.sum(bn_sum_p[:, 0, :], axis=0) * n_inv
  var = jnp.sum(bn_sq_p[:, 0, :], axis=0) * n_inv - mu * mu          # biased variance
  scale = params["bn_gamma"] * lax.rsqrt(var + 1e-5)
  shift = params["bn_beta"] - mu * scale
  out_x = pl.pallas_call(
      _bn_apply_kernel,
      grid=(nvt,),
      in_specs=[pl.BlockSpec((tv, Cout), lambda i: (i, 0)),
                pl.BlockSpec((1, Cout), lambda i: (0, 0)),
                pl.BlockSpec((1, Cout), lambda i: (0, 0))],
      out_specs=pl.BlockSpec((tv, Cout), lambda i: (i, 0)),
      out_shape=jax.ShapeDtypeStruct((V, Cout), f32),
      compiler_params=pltpu.CompilerParams(dimension_semantics=("parallel",)),
  )(y_pre, scale.reshape(1, Cout).astype(f32), shift.reshape(1, Cout).astype(f32))

  # relation update: tiny [R,Cin]x[Cin,Cout] matmul -> plain XLA (a dedicated
  # pallas_call is pure launch/DMA overhead at this size).
  out_rel = rel @ params["w_rel"]
  return out_x, out_rel


# ---------------------------------------------------------------------------
# Pure-JAX reference (FFT-based ccorr, exactly mirroring the torch code)
# ---------------------------------------------------------------------------
def _ccorr_ref(a, b):
  n = a.shape[-1]
  fa = jnp.fft.rfft(a, axis=-1)
  fb = jnp.fft.rfft(b, axis=-1)
  return jnp.fft.irfft(jnp.conj(fa) * fb, n=n, axis=-1).astype(jnp.float32)


def rgat_conv_reference(params, x, rel_repr, src, dst, edge_type, edge_norm):
  V, Cin = x.shape
  E = src.shape[0]
  rel = rel_repr
  src_h, dst_h, rel_e = x[src], x[dst], rel[edge_type]
  a = jnp.concatenate([src_h, rel_e, dst_h], axis=1) @ params["attn_w"].T
  e = jnp.where(a >= 0, a, 0.01 * a)                               # [E, 1]
  edh = _ccorr_ref(src_h, rel_e)
  msg = jnp.concatenate([edh[: E // 2] @ params["in_w"],
                         edh[E // 2:] @ params["out_w"]], axis=0)
  msg = jax.nn.softmax(msg, axis=1) * edge_norm.reshape(-1, 1)
  adj = jnp.arange(V)[:, None] == dst[None, :]
  sc = jnp.where(adj, e.reshape(1, E), -jnp.inf)
  alpha = jnp.where(adj, jax.nn.softmax(sc, axis=1), 0.0)
  h = (alpha @ msg) / 3.0
  loop = _ccorr_ref(x, jnp.broadcast_to(params["loop_rel"], x.shape)) @ params["loop_w"] / 3.0
  y = h + loop + params["bias"]
  mu = y.mean(axis=0)
  var = ((y - mu) ** 2).mean(axis=0)
  y = (y - mu) / jnp.sqrt(var + 1e-5) * params["bn_gamma"] + params["bn_beta"]
  return y, rel @ params["w_rel"]


# ---------------------------------------------------------------------------
if __name__ == "__main__":
  key = jax.random.PRNGKey(0)
  V, Cin, Cout, num_rel = 256, 32, 32, 4
  R = num_rel * 2
  E_half = 320
  E = 2 * E_half
  keys = jax.random.split(key, 12)

  # graph: ring (so every node has in-edges) + random extras; 2nd half = reversed edges
  ring_src = jnp.arange(V, dtype=jnp.int32)
  ring_dst = (ring_src + 1) % V
  n_extra = E_half - V
  ex_src = jax.random.randint(keys[0], (n_extra,), 0, V, dtype=jnp.int32)
  ex_dst = jax.random.randint(keys[1], (n_extra,), 0, V, dtype=jnp.int32)
  src0 = jnp.concatenate([ring_src, ex_src])
  dst0 = jnp.concatenate([ring_dst, ex_dst])
  etype0 = jax.random.randint(keys[2], (E_half,), 0, num_rel, dtype=jnp.int32)
  src = jnp.concatenate([src0, dst0])
  dst = jnp.concatenate([dst0, src0])
  edge_type = jnp.concatenate([etype0, etype0 + num_rel])
  edge_norm = jax.random.uniform(keys[3], (E,), minval=0.2, maxval=1.0,
                                 dtype=jnp.float32)

  x = jax.random.normal(keys[4], (V, Cin), dtype=jnp.float32)
  rel_repr = 0.5 * jax.random.normal(keys[5], (R, Cin), dtype=jnp.float32)

  def xavier(k, shape):   # xavier_normal with gain('relu') = sqrt(2)
    std = (2.0 ** 0.5) * (2.0 / (shape[0] + shape[1])) ** 0.5
    return std * jax.random.normal(k, shape, dtype=jnp.float32)

  params = dict(
      in_w=xavier(keys[6], (Cin, Cout)),
      out_w=xavier(keys[7], (Cin, Cout)),
      loop_w=xavier(keys[8], (Cin, Cout)),
      w_rel=xavier(keys[9], (Cin, Cout)),
      loop_rel=xavier(keys[10], (1, Cin)),
      attn_w=(1.0 / (3 * Cin) ** 0.5)
             * jax.random.normal(keys[11], (1, 3 * Cin), dtype=jnp.float32),
      bias=jnp.zeros((Cout,), jnp.float32),
      bn_gamma=jnp.ones((Cout,), jnp.float32),
      bn_beta=jnp.zeros((Cout,), jnp.float32),
  )

  out_x, out_rel = rgat_conv_forward(params, x, rel_repr, src, dst,
                                     edge_type, edge_norm,
                                     edge_tile=128, agg_edge_tile=128,
                                     node_tile=128)
  jax.block_until_ready((out_x, out_rel))

  ref_x, ref_rel = rgat_conv_reference(params, x, rel_repr, src, dst,
                                       edge_type, edge_norm)
  assert out_x.shape == (V, Cout) and out_rel.shape == (R, Cout)
  assert bool(jnp.allclose(out_x, ref_x, atol=5e-2, rtol=5e-2)), "node output mismatch"
  assert bool(jnp.allclose(out_rel, ref_rel, atol=5e-2, rtol=5e-2)), "relation output mismatch"
  print("KERNEL_OK")
</pallas_src>

<mosaic_0001>
module attributes {stable_mosaic.version = 11 : i64} {
  func.func @_edge_msg_kernel(%arg0: i32, %arg1: memref<8xi32, #tpu.memory_space<smem>>, %arg2: memref<1x32x32xbf16, #tpu.memory_space<vmem>>, %arg3: memref<128x32xbf16, #tpu.memory_space<vmem>>, %arg4: memref<128x32xbf16, #tpu.memory_space<vmem>>) attributes {dimension_semantics = [#tpu.dimension_semantics<parallel>], iteration_bounds = array<i64: 8>, scalar_prefetch = 1 : i64, scratch_operands = 0 : i64, tpu.core_type = #tpu.core_type<tc>, window_params = [{transform_indices = @transform_0, window_bounds = array<i64: 1, 32, 32>}, {transform_indices = @transform_1, window_bounds = array<i64: 128, 32>}, {transform_indices = @transform_2, window_bounds = array<i64: 128, 32>}]} {
    %c0 = arith.constant 0 : index
    %c0_0 = arith.constant 0 : index
    %0 = vector.load %arg3[%c0, %c0_0] : memref<128x32xbf16, #tpu.memory_space<vmem>>, vector<128x32xbf16>
    %c0_1 = arith.constant 0 : index
    %c0_2 = arith.constant 0 : index
    %c0_3 = arith.constant 0 : index
    %1 = vector.load %arg2[%c0_1, %c0_2, %c0_3] : memref<1x32x32xbf16, #tpu.memory_space<vmem>>, vector<1x32x32xbf16>
    %2 = vector.shape_cast %1 : vector<1x32x32xbf16> to vector<32x32xbf16>
    %cst = arith.constant dense<0.000000e+00> : vector<128x32xf32>
    %3 = tpu.matmul %0, %2, %cst {dimension_numbers = #tpu.dot_dimension_numbers<[1], [0], [0], [1], [0, 0, 1, 1], [], []>} : vector<128x32xbf16>, vector<32x32xbf16>, vector<128x32xf32> -> vector<128x32xf32>
    %cst_4 = arith.constant dense<0xFF800000> : vector<128xf32>
    %4 = vector.multi_reduction <maximumf>, %3, %cst_4 [1] : vector<128x32xf32> to vector<128xf32>
    %5 = vector.shape_cast %4 : vector<128xf32> to vector<128x1xf32>
    %6 = vector.broadcast %5 : vector<128x1xf32> to vector<128x32xf32>
    %7 = arith.subf %3, %6 : vector<128x32xf32>
    %8 = math.exp %7 : vector<128x32xf32>
    %cst_5 = arith.constant dense<0.000000e+00> : vector<128xf32>
    %9 = vector.multi_reduction <add>, %8, %cst_5 [1] : vector<128x32xf32> to vector<128xf32>
    %10 = vector.shape_cast %9 : vector<128xf32> to vector<128x1xf32>
    %11 = tpu.reciprocal %10 {approx = true} : vector<128x1xf32> -> vector<128x1xf32>
    %12 = vector.broadcast %11 : vector<128x1xf32> to vector<128x32xf32>
    %13 = arith.mulf %8, %12 : vector<128x32xf32>
    %14 = arith.truncf %13 : vector<128x32xf32> to vector<128x32xbf16>
    %c0_6 = arith.constant 0 : index
    %c0_7 = arith.constant 0 : index
    %15 = vector.load %arg4[%c0_6, %c0_7] : memref<128x32xbf16, #tpu.memory_space<vmem>>, vector<128x32xbf16>
    tpu.vector_store %arg4[%c0_6, %c0_7], %14 {strides = array<i32>} : memref<128x32xbf16, #tpu.memory_space<vmem>>, vector<128x32xbf16>,
    return
  }
  func.func @transform_0(%arg0: i32, %arg1: memref<8xi32, #tpu.memory_space<smem>>) -> (i32, i32, i32) {
    %0 = arith.index_cast %arg0 : i32 to index
    %1 = memref.load %arg1[%0] : memref<8xi32, #tpu.memory_space<smem>>
    %c0_i32 = arith.constant 0 : i32
    %c0_i32_0 = arith.constant 0 : i32
    %c0_i32_1 = arith.constant 0 : i32
    return %1, %c0_i32, %c0_i32_0 : i32, i32, i32
  }
  func.func @transform_1(%arg0: i32, %arg1: memref<8xi32, #tpu.memory_space<smem>>) -> (i32, i32) {
    %c0_i32 = arith.constant 0 : i32
    %c0_i32_0 = arith.constant 0 : i32
    return %arg0, %c0_i32 : i32, i32
  }
  func.func @transform_2(%arg0: i32, %arg1: memref<8xi32, #tpu.memory_space<smem>>) -> (i32, i32) {
    %c0_i32 = arith.constant 0 : i32
    %c0_i32_0 = arith.constant 0 : i32
    return %arg0, %c0_i32 : i32, i32
  }
}

</mosaic_0001>

<llo_original>
// kernel: tpu_custom_call.1
$region0: #{tpu_custom_call.1}
  #allocation0 [shape = 'u32[]', space=smem, size = 0x4, offset = 0x4, fixed_abs, tag = 'smem constant byte address 0x4 - core index']
  #allocation1 [shape = 'u32[72,128]{1,0:T(1,128)}', space=vmem, size = 0x9000, scoped, tag = 'internal scratch']
  #allocation2 [shape = 's32[1]{0}', space=sflag, size = 0x4, scoped, tag = 'scoped memory for tpu_custom_call.1']
  #allocation3 [shape = 'u8[512]{0}', space=smem, size = 0x200, scoped, tag = 'prefetched SMEM operand 0']
  %s0 = inlined_call_operand.vmem [shape: s32[8], index: 0, kind: input, shape index: {}]
  %s1 = inlined_call_operand.vmem [shape: bf16[16,32,32], index: 1, kind: input, shape index: {}]
  %s2 = inlined_call_operand.vmem [shape: bf16[1024,32], index: 2, kind: input, shape index: {}]
  %s3 = inlined_call_operand.vmem [shape: bf16[1024,32], index: 3, kind: output, shape index: {}]
  %s4 = sld [smem:[#allocation0]]
  $region41: #{tpu_custom_call.1} parent=0
    _
  %s6 = ssub.s32 1, %s4
  %s7 = scalar_select 0, %s6, %s4
  %s9 = sshll.u32 %s0, 4
  %s10 = int_to_ptr.vmem [resolvable:$true] %s9
  %12 = dma.vmem_to_smem %s10, 16, [#allocation3], [#allocation2]
  %14 = dma.done [#allocation2], 16
  %15 = sfence
  loop: start=0, step=1, limit=10
  $region2: #{tpu_custom_call.1} parent=0 // loop_pre_header
    _
  $region3: #{tpu_custom_call.1} parent=0 // loop_header
    %s17 = sphi 0, %s21
    %p18 = scmp.ge.s32.totalorder %s17, 10
    %s29 = sphi 0, %s31
    %s32 = sphi 0, %s29
    %s33 = sphi 0, %s32
    %s49 = sphi 0, %s33
    %s55 = sphi 0, %s57
    %s58 = sphi 0, %s55
    %s59 = sphi 0, %s58
    %s75 = sphi 0, %s59
    %s81 = sphi 0, %s83
    %s84 = sphi 0, %s81
    %s85 = sphi 0, %s84
    %s101 = sphi 0, %s85
  $region4: #{tpu_custom_call.1} parent=0 // loop_header_branch
    %20 = sbr.rel (%p18) target = $region8
  $region5: #{tpu_custom_call.1} parent=0 // loop_body
    %s22 = ssub.s32 %s17, 1
    %s23 = ssub.s32 %s17, 2
    %s24 = sadd.s32 %s17, 1
    %s25 = sld [smem:[#allocation3 + %s17]]
    %s26 = sld [smem:[#allocation3 + %s24]]
    %s27 = ssub.s32 %s25, %s26
    %p28 = scmp.eq.s32.totalorder %s27, 0
    %s30 = sadd.s32 %s29, 1
    %s31 = scalar_select %p28, %s29, %s30
    %p34 = pneg %p28
    %p35 = scmp.eq.s32.totalorder %s17, 7
    %p36 = por %p34, %p35
    %p37 = scmp.ne.s32.totalorder %s29, %s32
    %p38 = scmp.eq.s32.totalorder %s17, 0
    %p39 = por %p37, %p38
    %p40 = scmp.ne.s32.totalorder %s29, %s32
    %p41 = scmp.eq.s32.totalorder %s22, 7
    %p42 = por %p40, %p41
    %p43 = scmp.ne.s32.totalorder %s32, %s33
    %p44 = scmp.eq.s32.totalorder %s22, 0
    %p45 = por %p43, %p44
    %p46 = scmp.ne.s32.totalorder %s32, %s33
    %p47 = scmp.eq.s32.totalorder %s23, 7
    %p48 = por %p46, %p47
    %p50 = scmp.ne.s32.totalorder %s33, %s49
    %p51 = scmp.eq.s32.totalorder %s23, 0
    %p52 = por %p50, %p51
    %s53 = ssub.s32 %s17, %s24
    %p54 = scmp.eq.s32.totalorder %s53, 0
    %s56 = sadd.s32 %s55, 1
    %s57 = scalar_select %p54, %s55, %s56
    %p60 = pneg %p54
    %p61 = scmp.eq.s32.totalorder %s17, 7
    %p62 = por %p60, %p61
    %p63 = scmp.ne.s32.totalorder %s55, %s58
    %p64 = scmp.eq.s32.totalorder %s17, 0
    %p65 = por %p63, %p64
    %p66 = scmp.ne.s32.totalorder %s55, %s58
    %p67 = scmp.eq.s32.totalorder %s22, 7
    %p68 = por %p66, %p67
    %p69 = scmp.ne.s32.totalorder %s58, %s59
    %p70 = scmp.eq.s32.totalorder %s22, 0
    %p71 = por %p69, %p70
    %p72 = scmp.ne.s32.totalorder %s58, %s59
    %p73 = scmp.eq.s32.totalorder %s23, 7
    %p74 = por %p72, %p73
    %p76 = scmp.ne.s32.totalorder %s59, %s75
    %p77 = scmp.eq.s32.totalorder %s23, 0
    %p78 = por %p76, %p77
    %s79 = ssub.s32 %s17, %s24
    %p80 = scmp.eq.s32.totalorder %s79, 0
    %s82 = sadd.s32 %s81, 1
    %s83 = scalar_select %p80, %s81, %s82
    %p86 = pneg %p80
    %p87 = scmp.eq.s32.totalorder %s17, 7
    %p88 = por %p86, %p87
    %p89 = scmp.ne.s32.totalorder %s81, %s84
    %p90 = scmp.eq.s32.totalorder %s17, 0
    %p91 = por %p89, %p90
    %p92 = scmp.ne.s32.totalorder %s81, %s84
    %p93 = scmp.eq.s32.totalorder %s22, 7
    %p94 = por %p92, %p93
    %p95 = scmp.ne.s32.totalorder %s84, %s85
    %p96 = scmp.eq.s32.totalorder %s22, 0
    %p97 = por %p95, %p96
    %p98 = scmp.ne.s32.totalorder %s84, %s85
    %p99 = scmp.eq.s32.totalorder %s23, 7
    %p100 = por %p98, %p99
    %p102 = scmp.ne.s32.totalorder %s85, %s101
    %p103 = scmp.eq.s32.totalorder %s23, 0
    %p104 = por %p102, %p103
    %p105 = scmp.le.s32.totalorder 1, %s17
    %p106 = scmp.lt.s32.totalorder %s17, 9
    %p107 = pnand %p105, %p106
    %p108 = pneg %p107
    // Predicated region
    $region9: #{tpu_custom_call.1} parent=5 // pred_check
      _
    $region10: #{tpu_custom_call.1} parent=5 // pred_check_branch
      %110 = sbr.rel (%p107) target = $region12
    $region11: #{tpu_custom_call.1} parent=5 // pred_region
      %s111 = ssub.s32 %s17, 1
    $region12: #{tpu_custom_call.1} parent=5 // pred_fallthru
      _
    %p112 = scmp.lt.s32.totalorder %s17, 8
    // Predicated region
    $region13: #{tpu_custom_call.1} parent=5 // pred_check
      %p113 = pneg %p112
    $region14: #{tpu_custom_call.1} parent=5 // pred_check_branch
      %115 = sbr.rel (%p113) target = $region16
    $region15: #{tpu_custom_call.1} parent=5 // pred_region
      // Predicated region
      $region17: #{tpu_custom_call.1} parent=15 // pred_check
        %p116 = pneg %p39
      $region18: #{tpu_custom_call.1} parent=15 // pred_check_branch
        %118 = sbr.rel (%p116) target = $region20
      $region19: #{tpu_custom_call.1} parent=15 // pred_region
        %s119 = sld [smem:[#allocation3 + %s17]]
        %p120 = scmp.lt.s32.totalorder %s119, 15
        %s121 = scalar_select %p120, %s119, 15
        %s122 = smul.addr %s121, 4
        %s123 = smul.addr %s122, 4
        %s124 = scalar_lea.vmem %s1, %s123
        %s125 = sld [smem:[#allocation3 + %s17]]
      $region20: #{tpu_custom_call.1} parent=15 // pred_fallthru
        _
      // Predicated region
      $region21: #{tpu_custom_call.1} parent=15 // pred_check
        %p126 = pneg %p65
      $region22: #{tpu_custom_call.1} parent=15 // pred_check_branch
        %128 = sbr.rel (%p126) target = $region24
      $region23: #{tpu_custom_call.1} parent=15 // pred_region
        %s129 = smul.u32 16, %s17
        %p130 = scmp.lt.s32.totalorder %s129, 127
        %s131 = scalar_select %p130, %s129, 127
        %s132 = smul.addr %s131, 4
        %s133 = scalar_lea.vmem %s2, %s132
        %s134 = smul.u32 16, %s17
      $region24: #{tpu_custom_call.1} parent=15 // pred_fallthru
        _
    $region16: #{tpu_custom_call.1} parent=5 // pred_fallthru
      _
    %p135 = scmp.le.s32.totalorder 1, %s17
    %p136 = scmp.lt.s32.totalorder %s17, 9
    %p137 = pnand %p135, %p136
    %p138 = pneg %p137
    // Predicated region
    $region25: #{tpu_custom_call.1} parent=5 // pred_check
      _
    $region26: #{tpu_custom_call.1} parent=5 // pred_check_branch
      %140 = sbr.rel (%p137) target = $region28
    $region27: #{tpu_custom_call.1} parent=5 // pred_region
      %s141 = ssub.s32 %s17, 1
      %s142 = sld [smem:[#allocation3 + %s22]]
      %p143 = scmp.lt.s32.totalorder %s142, 15
      %s144 = scalar_select %p143, %s142, 15
      %s145 = smul.addr %s144, 4
      %s146 = smul.addr %s145, 4
      %s147 = scalar_lea.vmem %s1, %s146
      %p148 = pneg %p45
      %p149 = pneg %p42
      %s150 = smul.u32 16, %s22
      %p151 = scmp.lt.s32.totalorder %s150, 127
      %s152 = scalar_select %p151, %s150, 127
      %s153 = smul.addr %s152, 4
      %s154 = scalar_lea.vmem %s2, %s153
      %p155 = pneg %p71
      %p156 = pneg %p68
      %p157 = pneg %p97
      %p158 = pneg %p94
      %s159 = smul.u32 16, %s22
      %p160 = scmp.lt.s32.totalorder %s159, 127
      %s161 = scalar_select %p160, %s159, 127
      %s162 = smul.addr %s161, 4
      %s163 = scalar_lea.vmem %s3, %s162
      %s164 = sld [smem:[#allocation3 + %s22]]
      %p165 = scmp.lt.s32.totalorder %s164, 15
      %s166 = scalar_select %p165, %s164, 15
      %s167 = smul.addr %s166, 4
      %s168 = smul.addr %s167, 4
      %s169 = scalar_lea.vmem %s1, %s168
      %s170 = sld [smem:[#allocation3 + %s22]]
      %s171 = smul.u32 16, %s22
      %p172 = scmp.lt.s32.totalorder %s171, 127
      %s173 = scalar_select %p172, %s171, 127
      %s174 = smul.addr %s173, 4
      %s175 = scalar_lea.vmem %s2, %s174
      %s176 = smul.u32 16, %s22
      %s177 = smul.u32 16, %s22
      %p178 = scmp.lt.s32.totalorder %s177, 127
      %s179 = scalar_select %p178, %s177, 127
      %s180 = smul.addr %s179, 4
      %s181 = scalar_lea.vmem %s3, %s180
      %s182 = smul.u32 16, %s22
      %v184 = vld [vmem:[%s175] sm:$0xf]
      %v185 = vld [vmem:[%s175 + $0x4] sm:$0xf]
      %v186 = vld [vmem:[%s175 + $0x8] sm:$0xf]
      %v187 = vld [vmem:[%s175 + $0xc] sm:$0xf]
      %v188 = vld [vmem:[%s175 + $0x10] sm:$0xf]
      %v189 = vld [vmem:[%s175 + $0x14] sm:$0xf]
      %v190 = vld [vmem:[%s175 + $0x18] sm:$0xf]
      %v191 = vld [vmem:[%s175 + $0x1c] sm:$0xf]
      %v192 = vld [vmem:[%s175 + $0x20] sm:$0xf]
      %v193 = vld [vmem:[%s175 + $0x24] sm:$0xf]
      %v194 = vld [vmem:[%s175 + $0x28] sm:$0xf]
      %v195 = vld [vmem:[%s175 + $0x2c] sm:$0xf]
      %v196 = vld [vmem:[%s175 + $0x30] sm:$0xf]
      %v197 = vld [vmem:[%s175 + $0x34] sm:$0xf]
      %v198 = vld [vmem:[%s175 + $0x38] sm:$0xf]
      %v199 = vld [vmem:[%s175 + $0x3c] sm:$0xf]
      %v200 = vld [vmem:[%s169] sm:$0xf]
      %v201 = vld [vmem:[%s169 + $0x4] sm:$0xf]
      %v202 = vld [vmem:[%s169 + $0x8] sm:$0xf]
      %v203 = vld [vmem:[%s169 + $0xc] sm:$0xf]
      %v220 = vunpack.c.l.b16 %v184
      %v221 = vunpack.c.l.b16 %v185
      %v222 = vunpack.c.l.b16 %v186
      %v223 = vunpack.c.l.b16 %v187
      %v224 = vunpack.c.l.b16 %v188
      %v225 = vunpack.c.l.b16 %v189
      %v226 = vunpack.c.l.b16 %v190
      %v227 = vunpack.c.l.b16 %v191
      %v228 = vunpack.c.l.b16 %v192
      %v229 = vunpack.c.l.b16 %v193
      %v230 = vunpack.c.l.b16 %v194
      %v231 = vunpack.c.l.b16 %v195
      %v232 = vunpack.c.l.b16 %v196
      %v233 = vunpack.c.l.b16 %v197
      %v234 = vunpack.c.l.b16 %v198
      %v235 = vunpack.c.l.b16 %v199
      %v236 = vpack.c.b16 %v221, %v220
      %v237 = vpack.c.b16 %v223, %v222
      %v238 = vpack.c.b16 %v225, %v224
      %v239 = vpack.c.b16 %v227, %v226
      %v240 = vpack.c.b16 %v229, %v228
      %v241 = vpack.c.b16 %v231, %v230
      %v242 = vpack.c.b16 %v233, %v232
      %v243 = vpack.c.b16 %v235, %v234
      %v248 = vunpack.c.l.b16 %v200
      %v249 = vunpack.c.l.b16 %v201
      %v250 = vunpack.c.l.b16 %v202
      %v251 = vunpack.c.l.b16 %v203
      %v252 = vpack.c.b16 %v249, %v248
      %v253 = vpack.c.b16 %v251, %v250
      %vm256 = vcmask 261120
      %v258 = vsel %vm256, %v236, 0
      %v261 = vsel %vm256, %v237, 0
      %v264 = vsel %vm256, %v238, 0
      %v267 = vsel %vm256, %v239, 0
      %v270 = vsel %vm256, %v240, 0
      %v273 = vsel %vm256, %v241, 0
      %v276 = vsel %vm256, %v242, 0
      %v279 = vsel %vm256, %v243, 0
      %281 = vmatpush.bf16.msra.mxu0 0
      %282 = vmatpush.bf16.msra.mxu0 0
      %283 = vmatpush.bf16.msra.mxu0 0
      %284 = vmatpush.bf16.msra.mxu0 0
      %285 = vmatpush.bf16.msra.mxu0 0
      %286 = vmatpush.bf16.msra.mxu0 0
      %287 = vmatpush.bf16.msra.mxu0 %v253
      %288 = vmatpush.bf16.msra.mxu0 %v252
      %289 = vmatmul.bf16.gmra.mxu0 %v258
      %v290 = vpop.f32.mrf.mxu0
      %v291 = vadd.f32 0.0, %v290
      %v292 = vpop.f32.mrf.mxu0
      %v293 = vadd.f32 0.0, %v292
      %294 = vmatmul.bf16.gmra.mxu0 %v261
      %v295 = vpop.f32.mrf.mxu0
      %v296 = vadd.f32 0.0, %v295
      %v297 = vpop.f32.mrf.mxu0
      %v298 = vadd.f32 0.0, %v297
      %299 = vmatmul.bf16.gmra.mxu0 %v264
      %v300 = vpop.f32.mrf.mxu0
      %v301 = vadd.f32 0.0, %v300
      %v302 = vpop.f32.mrf.mxu0
      %v303 = vadd.f32 0.0, %v302
      %304 = vmatmul.bf16.gmra.mxu0 %v267
      %v305 = vpop.f32.mrf.mxu0
      %v306 = vadd.f32 0.0, %v305
      %v307 = vpop.f32.mrf.mxu0
      %v308 = vadd.f32 0.0, %v307
      %309 = vmatmul.bf16.gmra.mxu0 %v270
      %v310 = vpop.f32.mrf.mxu0
      %v311 = vadd.f32 0.0, %v310
      %v312 = vpop.f32.mrf.mxu0
      %v313 = vadd.f32 0.0, %v312
      %314 = vmatmul.bf16.gmra.mxu0 %v273
      %v315 = vpop.f32.mrf.mxu0
      %v316 = vadd.f32 0.0, %v315
      %v317 = vpop.f32.mrf.mxu0
      %v318 = vadd.f32 0.0, %v317
      %319 = vmatmul.bf16.gmra.mxu0 %v276
      %v320 = vpop.f32.mrf.mxu0
      %v321 = vadd.f32 0.0, %v320
      %v322 = vpop.f32.mrf.mxu0
      %v323 = vadd.f32 0.0, %v322
      %324 = vmatmul.bf16.gmra.mxu0 %v279
      %v325 = vpop.f32.mrf.mxu0
      %v326 = vadd.f32 0.0, %v325
      %v327 = vpop.f32.mrf.mxu0
      %v328 = vadd.f32 0.0, %v327
      %329 = vdwg.mxu0
      %v330 = vsel %vm256, %v291, -inf
      %331 = vmax.xlane.f32.xlu0 %v330
      %v332 = vpop.xlane.xlu0 %331
      %v333 = vsel %vm256, %v293, -inf
      %334 = vmax.xlane.f32.xlu0 %v333
      %v335 = vpop.xlane.xlu0 %334
      %v336 = vsel %vm256, %v296, -inf
      %337 = vmax.xlane.f32.xlu0 %v336
      %v338 = vpop.xlane.xlu0 %337
      %v339 = vsel %vm256, %v298, -inf
      %340 = vmax.xlane.f32.xlu0 %v339
      %v341 = vpop.xlane.xlu0 %340
      %v342 = vsel %vm256, %v301, -inf
      %343 = vmax.xlane.f32.xlu0 %v342
      %v344 = vpop.xlane.xlu0 %343
      %v345 = vsel %vm256, %v303, -inf
      %346 = vmax.xlane.f32.xlu0 %v345
      %v347 = vpop.xlane.xlu0 %346
      %v348 = vsel %vm256, %v306, -inf
      %349 = vmax.xlane.f32.xlu0 %v348
      %v350 = vpop.xlane.xlu0 %349
      %v351 = vsel %vm256, %v308, -inf
      %352 = vmax.xlane.f32.xlu0 %v351
      %v353 = vpop.xlane.xlu0 %352
      %v354 = vsel %vm256, %v311, -inf
      %355 = vmax.xlane.f32.xlu0 %v354
      %v356 = vpop.xlane.xlu0 %355
      %v357 = vsel %vm256, %v313, -inf
      %358 = vmax.xlane.f32.xlu0 %v357
      %v359 = vpop.xlane.xlu0 %358
      %v360 = vsel %vm256, %v316, -inf
      %361 = vmax.xlane.f32.xlu0 %v360
      %v362 = vpop.xlane.xlu0 %361
      %v363 = vsel %vm256, %v318, -inf
      %364 = vmax.xlane.f32.xlu0 %v363
      %v365 = vpop.xlane.xlu0 %364
      %v366 = vsel %vm256, %v321, -inf
      %367 = vmax.xlane.f32.xlu0 %v366
      %v368 = vpop.xlane.xlu0 %367
      %v369 = vsel %vm256, %v323, -inf
      %370 = vmax.xlane.f32.xlu0 %v369
      %v371 = vpop.xlane.xlu0 %370
      %v372 = vsel %vm256, %v326, -inf
      %373 = vmax.xlane.f32.xlu0 %v372
      %v374 = vpop.xlane.xlu0 %373
      %v375 = vsel %vm256, %v328, -inf
      %376 = vmax.xlane.f32.xlu0 %v375
      %v377 = vpop.xlane.xlu0 %376
      %v378 = vsub.f32 %v291, %v332
      %v379 = vsub.f32 %v293, %v335
      %v380 = vsub.f32 %v296, %v338
      %v381 = vsub.f32 %v298, %v341
      %v382 = vsub.f32 %v301, %v344
      %v383 = vsub.f32 %v303, %v347
      %v384 = vsub.f32 %v306, %v350
      %v385 = vsub.f32 %v308, %v353
      %v386 = vsub.f32 %v311, %v356
      %v387 = vsub.f32 %v313, %v359
      %v388 = vsub.f32 %v316, %v362
      %v389 = vsub.f32 %v318, %v365
      %v390 = vsub.f32 %v321, %v368
      %v391 = vsub.f32 %v323, %v371
      %v392 = vsub.f32 %v326, %v374
      %v393 = vsub.f32 %v328, %v377
      %v394 = vmul.f32 %v378, 1.442695
      %v395 = vpow.pop %v394
      %v396 = vmul.f32 %v379, 1.442695
      %v397 = vpow.pop %v396
      %v398 = vmul.f32 %v380, 1.442695
      %v399 = vpow.pop %v398
      %v400 = vmul.f32 %v381, 1.442695
      %v401 = vpow.pop %v400
      %v402 = vmul.f32 %v382, 1.442695
      %v403 = vpow.pop %v402
      %v404 = vmul.f32 %v383, 1.442695
      %v405 = vpow.pop %v404
      %v406 = vmul.f32 %v384, 1.442695
      %v407 = vpow.pop %v406
      %v408 = vmul.f32 %v385, 1.442695
      %v409 = vpow.pop %v408
      %v410 = vmul.f32 %v386, 1.442695
      %v411 = vpow.pop %v410
      %v412 = vmul.f32 %v387, 1.442695
      %v413 = vpow.pop %v412
      %v414 = vmul.f32 %v388, 1.442695
      %v415 = vpow.pop %v414
      %v416 = vmul.f32 %v389, 1.442695
      %v417 = vpow.pop %v416
      %v418 = vmul.f32 %v390, 1.442695
      %v419 = vpow.pop %v418
      %v420 = vmul.f32 %v391, 1.442695
      %v421 = vpow.pop %v420
      %v422 = vmul.f32 %v392, 1.442695
      %v423 = vpow.pop %v422
      %v424 = vmul.f32 %v393, 1.442695
      %v425 = vpow.pop %v424
      %v426 = vsel %vm256, %v395, 0.0
      %427 = vadd.xlane.f32.xlu0 %v426
      %v428 = vpop.xlane.xlu0 %427
      %v429 = vsel %vm256, %v397, 0.0
      %430 = vadd.xlane.f32.xlu0 %v429
      %v431 = vpop.xlane.xlu0 %430
      %v432 = vsel %vm256, %v399, 0.0
      %433 = vadd.xlane.f32.xlu0 %v432
      %v434 = vpop.xlane.xlu0 %433
      %v435 = vsel %vm256, %v401, 0.0
      %436 = vadd.xlane.f32.xlu0 %v435
      %v437 = vpop.xlane.xlu0 %436
      %v438 = vsel %vm256, %v403, 0.0
      %439 = vadd.xlane.f32.xlu0 %v438
      %v440 = vpop.xlane.xlu0 %439
      %v441 = vsel %vm256, %v405, 0.0
      %442 = vadd.xlane.f32.xlu0 %v441
      %v443 = vpop.xlane.xlu0 %442
      %v444 = vsel %vm256, %v407, 0.0
      %445 = vadd.xlane.f32.xlu0 %v444
      %v446 = vpop.xlane.xlu0 %445
      %v447 = vsel %vm256, %v409, 0.0
      %448 = vadd.xlane.f32.xlu0 %v447
      %v449 = vpop.xlane.xlu0 %448
      %v450 = vsel %vm256, %v411, 0.0
      %451 = vadd.xlane.f32.xlu0 %v450
      %v452 = vpop.xlane.xlu0 %451
      %v453 = vsel %vm256, %v413, 0.0
      %454 = vadd.xlane.f32.xlu0 %v453
      %v455 = vpop.xlane.xlu0 %454
      %v456 = vsel %vm256, %v415, 0.0
      %457 = vadd.xlane.f32.xlu0 %v456
      %v458 = vpop.xlane.xlu0 %457
      %v459 = vsel %vm256, %v417, 0.0
      %460 = vadd.xlane.f32.xlu0 %v459
      %v461 = vpop.xlane.xlu0 %460
      %v462 = vsel %vm256, %v419, 0.0
      %463 = vadd.xlane.f32.xlu0 %v462
      %v464 = vpop.xlane.xlu0 %463
      %v465 = vsel %vm256, %v421, 0.0
      %466 = vadd.xlane.f32.xlu0 %v465
      %v467 = vpop.xlane.xlu0 %466
      %v468 = vsel %vm256, %v423, 0.0
      %469 = vadd.xlane.f32.xlu0 %v468
      %v470 = vpop.xlane.xlu0 %469
      %v471 = vsel %vm256, %v425, 0.0
      %472 = vadd.xlane.f32.xlu0 %v471
      %v473 = vpop.xlane.xlu0 %472
      %v474 = vrcp.pop %v428
      %v475 = vrcp.pop %v431
      %v476 = vrcp.pop %v434
      %v477 = vrcp.pop %v437
      %v478 = vrcp.pop %v440
      %v479 = vrcp.pop %v443
      %v480 = vrcp.pop %v446
      %v481 = vrcp.pop %v449
      %v482 = vrcp.pop %v452
      %v483 = vrcp.pop %v455
      %v484 = vrcp.pop %v458
      %v485 = vrcp.pop %v461
      %v486 = vrcp.pop %v464
      %v487 = vrcp.pop %v467
      %v488 = vrcp.pop %v470
      %v489 = vrcp.pop %v473
      %v490 = vmul.f32 %v395, %v474
      %v491 = vmul.f32 %v397, %v475
      %v492 = vmul.f32 %v399, %v476
      %v493 = vmul.f32 %v401, %v477
      %v494 = vmul.f32 %v403, %v478
      %v495 = vmul.f32 %v405, %v479
      %v496 = vmul.f32 %v407, %v480
      %v497 = vmul.f32 %v409, %v481
      %v498 = vmul.f32 %v411, %v482
      %v499 = vmul.f32 %v413, %v483
      %v500 = vmul.f32 %v415, %v484
      %v501 = vmul.f32 %v417, %v485
      %v502 = vmul.f32 %v419, %v486
      %v503 = vmul.f32 %v421, %v487
      %v504 = vmul.f32 %v423, %v488
      %v505 = vmul.f32 %v425, %v489
      %v506 = vpack.c.bf16 %v490, %v490
      %v507 = vpack.c.bf16 %v491, %v491
      %v508 = vpack.c.bf16 %v492, %v492
      %v509 = vpack.c.bf16 %v493, %v493
      %v510 = vpack.c.bf16 %v494, %v494
      %v511 = vpack.c.bf16 %v495, %v495
      %v512 = vpack.c.bf16 %v496, %v496
      %v513 = vpack.c.bf16 %v497, %v497
      %v514 = vpack.c.bf16 %v498, %v498
      %v515 = vpack.c.bf16 %v499, %v499
      %v516 = vpack.c.bf16 %v500, %v500
      %v517 = vpack.c.bf16 %v501, %v501
      %v518 = vpack.c.bf16 %v502, %v502
      %v519 = vpack.c.bf16 %v503, %v503
      %v520 = vpack.c.bf16 %v504, %v504
      %v521 = vpack.c.bf16 %v505, %v505
      %vm522 = vcmask 257024
      %523 = vst.msk [vmem:[%s181] sm:$0xf] %vm522, %v506
      %524 = vst.msk [vmem:[%s181 + $0x4] sm:$0xf] %vm522, %v507
      %525 = vst.msk [vmem:[%s181 + $0x8] sm:$0xf] %vm522, %v508
      %526 = vst.msk [vmem:[%s181 + $0xc] sm:$0xf] %vm522, %v509
      %527 = vst.msk [vmem:[%s181 + $0x10] sm:$0xf] %vm522, %v510
      %528 = vst.msk [vmem:[%s181 + $0x14] sm:$0xf] %vm522, %v511
      %529 = vst.msk [vmem:[%s181 + $0x18] sm:$0xf] %vm522, %v512
      %530 = vst.msk [vmem:[%s181 + $0x1c] sm:$0xf] %vm522, %v513
      %531 = vst.msk [vmem:[%s181 + $0x20] sm:$0xf] %vm522, %v514
      %532 = vst.msk [vmem:[%s181 + $0x24] sm:$0xf] %vm522, %v515
      %533 = vst.msk [vmem:[%s181 + $0x28] sm:$0xf] %vm522, %v516
      %534 = vst.msk [vmem:[%s181 + $0x2c] sm:$0xf] %vm522, %v517
      %535 = vst.msk [vmem:[%s181 + $0x30] sm:$0xf] %vm522, %v518
      %536 = vst.msk [vmem:[%s181 + $0x34] sm:$0xf] %vm522, %v519
      %537 = vst.msk [vmem:[%s181 + $0x38] sm:$0xf] %vm522, %v520
      %538 = vst.msk [vmem:[%s181 + $0x3c] sm:$0xf] %vm522, %v521
      %s539 = smul.u32 16, %s22
      %p540 = scmp.lt.s32.totalorder %s539, 127
      %s541 = scalar_select %p540, %s539, 127
      %s542 = smul.addr %s541, 4
      %s543 = scalar_lea.vmem %s3, %s542
      // Predicated region
      $region29: #{tpu_custom_call.1} parent=27 // pred_check
        %p544 = pneg %p94
      $region30: #{tpu_custom_call.1} parent=27 // pred_check_branch
        %546 = sbr.rel (%p544) target = $region32
      $region31: #{tpu_custom_call.1} parent=27 // pred_region
        %s547 = smul.u32 16, %s22
      $region32: #{tpu_custom_call.1} parent=27 // pred_fallthru
        _
    $region28: #{tpu_custom_call.1} parent=5 // pred_fallthru
      _
    %p548 = scmp.le.s32.totalorder 2, %s17
    // Predicated region
    $region33: #{tpu_custom_call.1} parent=5 // pred_check
      %p549 = pneg %p548
    $region34: #{tpu_custom_call.1} parent=5 // pred_check_branch
      %551 = sbr.rel (%p549) target = $region36
    $region35: #{tpu_custom_call.1} parent=5 // pred_region
      %s552 = ssub.s32 %s17, 2
      // Predicated region
      $region37: #{tpu_custom_call.1} parent=35 // pred_check
        %p553 = pneg %p100
      $region38: #{tpu_custom_call.1} parent=35 // pred_check_branch
        %555 = sbr.rel (%p553) target = $region40
      $region39: #{tpu_custom_call.1} parent=35 // pred_region
        %s556 = smul.u32 16, %s23
        %p557 = scmp.lt.s32.totalorder %s556, 127
        %s558 = scalar_select %p557, %s556, 127
        %s559 = smul.addr %s558, 4
        %s560 = scalar_lea.vmem %s3, %s559
      $region40: #{tpu_custom_call.1} parent=35 // pred_fallthru
        _
    $region36: #{tpu_custom_call.1} parent=5 // pred_fallthru
      _
  $region6: #{tpu_custom_call.1} parent=0 // loop_footer
    %s21 = sadd.s32 1, %s17
  $region7: #{tpu_custom_call.1} parent=0 // loop_footer_branch
    %16 = sbr.rel target = $region3
  $region8: #{tpu_custom_call.1} parent=0 // loop_exit
    _

</llo_original>
